<compile_context>
chip_gen: v7x
topology: tpu7x:2x2x1
jax: 0.10.0
libtpu: 0.0.40
codegen_flags: <defaults>
</compile_context>

<pallas_src>
import functools

import jax
import jax.numpy as jnp
from jax import lax
from jax.experimental import pallas as pl
from jax.experimental.pallas import tpu as pltpu


# ----------------------------- Pallas kernels ------------------------------ #

def _att_weighted_sum_kernel(valid_sref, x_ref, a_ref, o_ref, *, t_len, b_tile):
    """out[bb, c, hw] = sum_t x[bb, t, c, hw] * attn[bb, t, hw] * valid[b, t].

    valid_sref : SMEM (B, T) float32 (1.0 = keep, 0.0 = padded frame)
    x_ref      : VMEM (b_tile, T, c_tile, hw_tile)
    a_ref      : VMEM (1, b_tile, T, hw_tile)
    o_ref      : VMEM (b_tile, c_tile, hw_tile)
    """
    bblk = pl.program_id(1)
    for bb in range(b_tile):                              # static (small)
        b = bblk * b_tile + bb
        a0 = a_ref[0, bb, pl.ds(0, 1)].astype(jnp.float32)          # (1, hw)
        acc = x_ref[bb, 0].astype(jnp.float32) * (a0 * valid_sref[b, 0])
        if t_len <= 16:                                   # short T: full unroll
            for t in range(1, t_len):
                at = a_ref[0, bb, pl.ds(t, 1)].astype(jnp.float32)
                acc = acc + x_ref[bb, t].astype(jnp.float32) * (at * valid_sref[b, t])
        else:                                             # long T: bounded live ranges
            def body(t, acc):
                at = a_ref[0, bb, pl.ds(t, 1)].astype(jnp.float32)
                xt = x_ref[bb, pl.ds(t, 1)][0].astype(jnp.float32)
                return acc + xt * (at * valid_sref[b, t])
            acc = lax.fori_loop(1, t_len, body, acc, unroll=4)
        o_ref[bb] = acc.astype(o_ref.dtype)


def _weighted_mean_kernel(w_sref, x_ref, o_ref, *, t_len, b_tile):
    """out[bb, c, hw] = sum_t x[bb, t, c, hw] * w[b, t]  (weights pre-normalized).

    w_sref : SMEM (B, T) float32
    x_ref  : VMEM (b_tile, T, c_tile, hw_tile)
    o_ref  : VMEM (b_tile, c_tile, hw_tile)
    """
    bblk = pl.program_id(0)
    for bb in range(b_tile):
        b = bblk * b_tile + bb
        acc = x_ref[bb, 0].astype(jnp.float32) * w_sref[b, 0]
        if t_len <= 16:
            for t in range(1, t_len):
                acc = acc + x_ref[bb, t].astype(jnp.float32) * w_sref[b, t]
        else:
            def body(t, acc):
                xt = x_ref[bb, pl.ds(t, 1)][0].astype(jnp.float32)
                return acc + xt * w_sref[b, t]
            acc = lax.fori_loop(1, t_len, body, acc, unroll=4)
        o_ref[bb] = acc.astype(o_ref.dtype)


# --------------------------- tile / budget selection ------------------------ #

def _round_up(n, m):
    return ((n + m - 1) // m) * m


def _vmem_capacity_bytes():
    try:
        return int(pltpu.get_tpu_info().vmem_capacity_bytes)
    except Exception:
        return 64 << 20        # conservative: v7x per-TC physical VMEM


def _select_tiles(B, T, Cg, HW, itemsize, has_attn):
    """Pick (b_tile, c_tile, hw_tile, HW_pad, vmem_limit_bytes)."""
    sublane = 16 if itemsize == 2 else 8
    HW_pad = _round_up(HW, 128)

    cap = _vmem_capacity_bytes()
    budget = min(cap // 4, 24 << 20)        # total double-buffered block budget
    acc_elems_cap = 32 * 1024               # f32 acc <= ~32 vregs (no spills)

    # hw tile: largest multiple of 128 dividing HW_pad, <= 2048 lanes.
    hw_tile = min(HW_pad, 2048)
    while HW_pad % hw_tile:
        hw_tile -= 128

    def block_bytes(b_t, c_t, hw_t):
        x_b = b_t * T * c_t * hw_t * itemsize
        a_b = b_t * T * hw_t * 4 if has_attn else 0
        o_b = b_t * c_t * hw_t * itemsize
        return 2 * (x_b + a_b + o_b)         # x2: double-buffered pipeline

    # channel tile: divides Cg, multiple of `sublane`, fits acc cap & budget.
    if Cg % sublane == 0:
        c_tile = min(Cg, max(sublane, (acc_elems_cap // hw_tile) // sublane * sublane))
        while Cg % c_tile:
            c_tile -= sublane
        while c_tile > sublane and block_bytes(1, c_tile, hw_tile) > budget:
            c_tile -= sublane
            while Cg % c_tile:
                c_tile -= sublane
    else:
        c_tile = Cg                          # full extent (only legal when Cg == C)

    # if still over budget, shrink the lane tile.
    while hw_tile > 128 and block_bytes(1, c_tile, hw_tile) > budget:
        hw_tile -= 128
        while HW_pad % hw_tile:
            hw_tile -= 128

    # batch folding: amortize ~0.35us per-grid-step overhead for tiny blocks,
    # but keep >= 2 grid steps so both v7x TensorCores stay busy.
    b_tile = 1
    if c_tile == Cg and hw_tile == HW_pad:
        def n_steps(b_t):
            return (B // b_t) * (Cg // c_tile) * (HW_pad // hw_tile)
        while (b_tile < B and B % (2 * b_tile) == 0
               and block_bytes(b_tile, c_tile, hw_tile) < (2 << 20)
               and block_bytes(2 * b_tile, c_tile, hw_tile) <= budget
               and n_steps(2 * b_tile) >= 2):
            b_tile *= 2

    footprint = block_bytes(b_tile, c_tile, hw_tile)
    vmem_limit = max(footprint + (8 << 20), 16 << 20)     # headroom for scratch
    vmem_limit = min(vmem_limit, cap - (2 << 20))
    return b_tile, c_tile, hw_tile, HW_pad, vmem_limit


def _pad_lanes(a, HW, HW_pad):
    if HW_pad == HW:
        return a
    pad = [(0, 0)] * (a.ndim - 1) + [(0, HW_pad - HW)]
    return jnp.pad(a, pad)


# ------------------------------ Pallas wrappers ---------------------------- #

def _att_group_sum(x_flat, attn_flat, valid, cg):
    """x_flat (B,T,C,HW) * attn_flat (nH,B,T,HW) * valid (B,T) -> (B,C,HW).

    Head g writes channels [g*cg, (g+1)*cg) of the output (== torch's
    chunk-along-C followed by cat)."""
    B, T, C, HW = x_flat.shape
    nH = attn_flat.shape[0]
    itemsize = jnp.dtype(x_flat.dtype).itemsize
    sub = 16 if itemsize == 2 else 8
    assert C == nH * cg and (cg == C or cg % sub == 0), (
        "per-head channel count must be a sublane multiple or the full C")

    b_tile, c_tile, hw_tile, HW_pad, vmem_limit = _select_tiles(
        B, T, cg, HW, itemsize, has_attn=True)
    x_flat = _pad_lanes(x_flat, HW, HW_pad)
    attn_flat = _pad_lanes(attn_flat, HW, HW_pad)

    nc = cg // c_tile                     # channel blocks per head
    grid = (nH, B // b_tile, nc, HW_pad // hw_tile)

    out = pl.pallas_call(
        functools.partial(_att_weighted_sum_kernel, t_len=T, b_tile=b_tile),
        out_shape=jax.ShapeDtypeStruct((B, C, HW_pad), x_flat.dtype),
        grid=grid,
        in_specs=[
            pl.BlockSpec(memory_space=pltpu.MemorySpace.SMEM),              # valid
            pl.BlockSpec((b_tile, T, c_tile, hw_tile),
                         lambda h, b, c, s: (b, 0, h * nc + c, s)),          # x
            pl.BlockSpec((1, b_tile, T, hw_tile),
                         lambda h, b, c, s: (h, b, 0, s)),                   # attn
        ],
        out_specs=pl.BlockSpec((b_tile, c_tile, hw_tile),
                               lambda h, b, c, s: (b, h * nc + c, s)),
        compiler_params=pltpu.CompilerParams(
            dimension_semantics=("parallel",) * 4,
            vmem_limit_bytes=vmem_limit),
    )(valid, x_flat, attn_flat)
    return out[..., :HW] if HW_pad != HW else out


def _weighted_mean(x_flat, weights):
    """x_flat (B,T,C,HW) reduced over T with per-(b,t) scalar weights."""
    B, T, C, HW = x_flat.shape
    itemsize = jnp.dtype(x_flat.dtype).itemsize

    b_tile, c_tile, hw_tile, HW_pad, vmem_limit = _select_tiles(
        B, T, C, HW, itemsize, has_attn=False)
    x_flat = _pad_lanes(x_flat, HW, HW_pad)

    grid = (B // b_tile, C // c_tile, HW_pad // hw_tile)

    out = pl.pallas_call(
        functools.partial(_weighted_mean_kernel, t_len=T, b_tile=b_tile),
        out_shape=jax.ShapeDtypeStruct((B, C, HW_pad), x_flat.dtype),
        grid=grid,
        in_specs=[
            pl.BlockSpec(memory_space=pltpu.MemorySpace.SMEM),              # w
            pl.BlockSpec((b_tile, T, c_tile, hw_tile),
                         lambda b, c, s: (b, 0, c, s)),                      # x
        ],
        out_specs=pl.BlockSpec((b_tile, c_tile, hw_tile),
                               lambda b, c, s: (b, c, s)),
        compiler_params=pltpu.CompilerParams(
            dimension_semantics=("parallel",) * 3,
            vmem_limit_bytes=vmem_limit),
    )(weights, x_flat)
    return out[..., :HW] if HW_pad != HW else out


# ------------------------------ attn resizing ------------------------------ #
# Cheap, channel-free glue (bilinear upsample ~ align_corners=False, or
# AvgPool2d with kernel_size = w // H, matching the PyTorch branches).
# TODO(synk): jax.image.resize 'bilinear' is a close (not bit-exact) match for
# torch Upsample(align_corners=False); avg-pool branch assumes w % H == 0.

def _resize_attn_group(attn_mask, H, W):
    nH, B, T, h, w = attn_mask.shape
    a = attn_mask.reshape(nH * B, T, h, w)
    if H > w:
        a = jax.image.resize(a, (nH * B, T, H, W), method='bilinear')
    else:
        k = w // H                                   # AvgPool2d(kernel_size=k)
        a = a.reshape(nH * B, T, h // k, k, w // k, k).mean(axis=(3, 5))
    return a.reshape(nH, B, T, -1)                   # (nH, B, T, H*W)


def _resize_attn_mean(attn_mask, H, W):
    attn = attn_mask.mean(axis=0)                    # (B, T, h, w)
    B, T = attn.shape[:2]
    attn = jax.image.resize(attn, (B, T, H, W), method='bilinear')
    return attn.reshape(1, B, T, H * W)


# ---------------------------- aggregator forward --------------------------- #

def temporal_aggregator(x, pad_mask=None, attn_mask=None, *, mode='mean'):
    """x: (B, T, C, H, W).  pad_mask: (B, T) bool.  attn_mask: (nH, B, T, h, w)."""
    B, T, C, H, W = x.shape
    HW = H * W
    x_flat = x.reshape(B, T, C, HW)
    # Static branch only (jit-safe, no host sync). All-False pad_mask gives the
    # same result as the torch "no padding" branch.
    if pad_mask is not None:
        valid = (~pad_mask).astype(jnp.float32)
    else:
        valid = jnp.ones((B, T), jnp.float32)

    if mode == 'att_group':
        nH = attn_mask.shape[0]
        attn = _resize_attn_group(attn_mask, H, W).astype(jnp.float32)
        out = _att_group_sum(x_flat, attn, valid, C // nH)
        return out.reshape(B, C, H, W)

    if mode == 'att_mean':
        attn = _resize_attn_mean(attn_mask, H, W).astype(jnp.float32)
        out = _att_group_sum(x_flat, attn, valid, C)
        return out.reshape(B, C, H, W)

    # mode == 'mean'  (guard avoids 0/0 for a fully-padded batch row)
    w = valid / jnp.maximum(jnp.sum(valid, axis=1, keepdims=True), 1.0)
    out = _weighted_mean(x_flat, w)
    return out.reshape(B, C, H, W)


# --------------------------- plain-JAX reference --------------------------- #

def temporal_aggregator_ref(x, pad_mask=None, attn_mask=None, *, mode='mean'):
    B, T, C, H, W = x.shape
    has_pad = pad_mask is not None
    if mode == 'att_group':
        nH = attn_mask.shape[0]
        attn = _resize_attn_group(attn_mask, H, W).reshape(nH, B, T, H, W)
        if has_pad:
            attn = attn * (~pad_mask).astype(x.dtype)[None, :, :, None, None]
        xg = x.reshape(B, T, nH, C // nH, H, W)
        out = jnp.einsum('gbthw,btgchw->bgchw', attn, xg)
        return out.reshape(B, C, H, W)
    if mode == 'att_mean':
        attn = _resize_attn_mean(attn_mask, H, W).reshape(B, T, H, W)
        if has_pad:
            attn = attn * (~pad_mask).astype(x.dtype)[:, :, None, None]
        return jnp.einsum('bthw,btchw->bchw', attn, x)
    # mean
    if has_pad:
        v = (~pad_mask).astype(x.dtype)
        denom = jnp.maximum(v.sum(axis=1), 1.0)
        return ((x * v[:, :, None, None, None]).sum(axis=1)
                / denom[:, None, None, None])
    return x.mean(axis=1)


# ----------------------------------- main ----------------------------------- #

if __name__ == "__main__":
    key = jax.random.PRNGKey(0)
    kx, ka, kh = jax.random.split(key, 3)

    B, T, C, H, W = 2, 8, 64, 16, 16
    n_heads = 4

    x = jax.random.normal(kx, (B, T, C, H, W), jnp.float32)
    # low-res attention (8x8 < 16) -> bilinear-upsample branch
    attn_lo = jax.nn.softmax(
        jax.random.normal(ka, (n_heads, B, T, 8, 8), jnp.float32), axis=2)
    # high-res attention (32x32 > 16) -> AvgPool branch
    attn_hi = jax.nn.softmax(
        jax.random.normal(kh, (n_heads, B, T, 32, 32), jnp.float32), axis=2)
    # batch 0 has its last two frames padded; batch 1 has none
    pad_mask = jnp.zeros((B, T), bool).at[0, -2:].set(True)

    cases = [
        ('mean', pad_mask, None),
        ('mean', None, None),
        ('att_group', pad_mask, attn_lo),
        ('att_group', None, attn_lo),
        ('att_group', pad_mask, attn_hi),
        ('att_mean', pad_mask, attn_lo),
        ('att_mean', None, attn_lo),
    ]
    for mode, pm, am in cases:
        out = jax.block_until_ready(
            temporal_aggregator(x, pm, am, mode=mode))
        ref = jax.block_until_ready(
            temporal_aggregator_ref(x, pm, am, mode=mode))
        assert out.shape == (B, C, H, W), (mode, out.shape)
        err = float(jnp.max(jnp.abs(out - ref)))
        assert err < 2e-4, f"{mode}: max abs err = {err}"

    print("KERNEL_OK")
</pallas_src>

<mosaic_0001>
module attributes {stable_mosaic.version = 11 : i64} {
  func.func @_weighted_mean_kernel(%arg0: i32, %arg1: i32, %arg2: i32, %arg3: memref<2x8xf32, #tpu.memory_space<smem>>, %arg4: memref<1x8x64x256xf32, #tpu.memory_space<vmem>>, %arg5: memref<1x64x256xf32, #tpu.memory_space<vmem>>) attributes {dimension_semantics = [#tpu.dimension_semantics<parallel>, #tpu.dimension_semantics<parallel>, #tpu.dimension_semantics<parallel>], iteration_bounds = array<i64: 2, 1, 1>, scalar_prefetch = 0 : i64, scratch_operands = 0 : i64, tpu.core_type = #tpu.core_type<tc>, window_params = [{transform_indices = @transform_0, window_bounds = array<i64: 2, 8>}, {transform_indices = @transform_1, window_bounds = array<i64: 1, 8, 64, 256>}, {transform_indices = @transform_2, window_bounds = array<i64: 1, 64, 256>}]} {
    %c1_i32 = arith.constant 1 : i32
    %0 = arith.muli %arg0, %c1_i32 : i32
    %c0_i32 = arith.constant 0 : i32
    %1 = arith.addi %0, %c0_i32 : i32
    %c0 = arith.constant 0 : index
    %c0_0 = arith.constant 0 : index
    %c0_1 = arith.constant 0 : index
    %c0_2 = arith.constant 0 : index
    %2 = vector.load %arg4[%c0, %c0_0, %c0_1, %c0_2] : memref<1x8x64x256xf32, #tpu.memory_space<vmem>>, vector<1x1x64x256xf32>
    %3 = vector.shape_cast %2 : vector<1x1x64x256xf32> to vector<64x256xf32>
    %4 = arith.index_cast %1 : i32 to index
    %c0_3 = arith.constant 0 : index
    %5 = memref.load %arg3[%4, %c0_3] : memref<2x8xf32, #tpu.memory_space<smem>>
    %6 = vector.broadcast %5 : f32 to vector<64x256xf32>
    %7 = arith.mulf %3, %6 : vector<64x256xf32>
    %c0_4 = arith.constant 0 : index
    %c1 = arith.constant 1 : index
    %c0_5 = arith.constant 0 : index
    %c0_6 = arith.constant 0 : index
    %8 = vector.load %arg4[%c0_4, %c1, %c0_5, %c0_6] : memref<1x8x64x256xf32, #tpu.memory_space<vmem>>, vector<1x1x64x256xf32>
    %9 = vector.shape_cast %8 : vector<1x1x64x256xf32> to vector<64x256xf32>
    %10 = arith.index_cast %1 : i32 to index
    %c1_7 = arith.constant 1 : index
    %11 = memref.load %arg3[%10, %c1_7] : memref<2x8xf32, #tpu.memory_space<smem>>
    %12 = vector.broadcast %11 : f32 to vector<64x256xf32>
    %13 = arith.mulf %9, %12 : vector<64x256xf32>
    %14 = arith.addf %7, %13 : vector<64x256xf32>
    %c0_8 = arith.constant 0 : index
    %c2 = arith.constant 2 : index
    %c0_9 = arith.constant 0 : index
    %c0_10 = arith.constant 0 : index
    %15 = vector.load %arg4[%c0_8, %c2, %c0_9, %c0_10] : memref<1x8x64x256xf32, #tpu.memory_space<vmem>>, vector<1x1x64x256xf32>
    %16 = vector.shape_cast %15 : vector<1x1x64x256xf32> to vector<64x256xf32>
    %17 = arith.index_cast %1 : i32 to index
    %c2_11 = arith.constant 2 : index
    %18 = memref.load %arg3[%17, %c2_11] : memref<2x8xf32, #tpu.memory_space<smem>>
    %19 = vector.broadcast %18 : f32 to vector<64x256xf32>
    %20 = arith.mulf %16, %19 : vector<64x256xf32>
    %21 = arith.addf %14, %20 : vector<64x256xf32>
    %c0_12 = arith.constant 0 : index
    %c3 = arith.constant 3 : index
    %c0_13 = arith.constant 0 : index
    %c0_14 = arith.constant 0 : index
    %22 = vector.load %arg4[%c0_12, %c3, %c0_13, %c0_14] : memref<1x8x64x256xf32, #tpu.memory_space<vmem>>, vector<1x1x64x256xf32>
    %23 = vector.shape_cast %22 : vector<1x1x64x256xf32> to vector<64x256xf32>
    %24 = arith.index_cast %1 : i32 to index
    %c3_15 = arith.constant 3 : index
    %25 = memref.load %arg3[%24, %c3_15] : memref<2x8xf32, #tpu.memory_space<smem>>
    %26 = vector.broadcast %25 : f32 to vector<64x256xf32>
    %27 = arith.mulf %23, %26 : vector<64x256xf32>
    %28 = arith.addf %21, %27 : vector<64x256xf32>
    %c0_16 = arith.constant 0 : index
    %c4 = arith.constant 4 : index
    %c0_17 = arith.constant 0 : index
    %c0_18 = arith.constant 0 : index
    %29 = vector.load %arg4[%c0_16, %c4, %c0_17, %c0_18] : memref<1x8x64x256xf32, #tpu.memory_space<vmem>>, vector<1x1x64x256xf32>
    %30 = vector.shape_cast %29 : vector<1x1x64x256xf32> to vector<64x256xf32>
    %31 = arith.index_cast %1 : i32 to index
    %c4_19 = arith.constant 4 : index
    %32 = memref.load %arg3[%31, %c4_19] : memref<2x8xf32, #tpu.memory_space<smem>>
    %33 = vector.broadcast %32 : f32 to vector<64x256xf32>
    %34 = arith.mulf %30, %33 : vector<64x256xf32>
    %35 = arith.addf %28, %34 : vector<64x256xf32>
    %c0_20 = arith.constant 0 : index
    %c5 = arith.constant 5 : index
    %c0_21 = arith.constant 0 : index
    %c0_22 = arith.constant 0 : index
    %36 = vector.load %arg4[%c0_20, %c5, %c0_21, %c0_22] : memref<1x8x64x256xf32, #tpu.memory_space<vmem>>, vector<1x1x64x256xf32>
    %37 = vector.shape_cast %36 : vector<1x1x64x256xf32> to vector<64x256xf32>
    %38 = arith.index_cast %1 : i32 to index
    %c5_23 = arith.constant 5 : index
    %39 = memref.load %arg3[%38, %c5_23] : memref<2x8xf32, #tpu.memory_space<smem>>
    %40 = vector.broadcast %39 : f32 to vector<64x256xf32>
    %41 = arith.mulf %37, %40 : vector<64x256xf32>
    %42 = arith.addf %35, %41 : vector<64x256xf32>
    %c0_24 = arith.constant 0 : index
    %c6 = arith.constant 6 : index
    %c0_25 = arith.constant 0 : index
    %c0_26 = arith.constant 0 : index
    %43 = vector.load %arg4[%c0_24, %c6, %c0_25, %c0_26] : memref<1x8x64x256xf32, #tpu.memory_space<vmem>>, vector<1x1x64x256xf32>
    %44 = vector.shape_cast %43 : vector<1x1x64x256xf32> to vector<64x256xf32>
    %45 = arith.index_cast %1 : i32 to index
    %c6_27 = arith.constant 6 : index
    %46 = memref.load %arg3[%45, %c6_27] : memref<2x8xf32, #tpu.memory_space<smem>>
    %47 = vector.broadcast %46 : f32 to vector<64x256xf32>
    %48 = arith.mulf %44, %47 : vector<64x256xf32>
    %49 = arith.addf %42, %48 : vector<64x256xf32>
    %c0_28 = arith.constant 0 : index
    %c7 = arith.constant 7 : index
    %c0_29 = arith.constant 0 : index
    %c0_30 = arith.constant 0 : index
    %50 = vector.load %arg4[%c0_28, %c7, %c0_29, %c0_30] : memref<1x8x64x256xf32, #tpu.memory_space<vmem>>, vector<1x1x64x256xf32>
    %51 = vector.shape_cast %50 : vector<1x1x64x256xf32> to vector<64x256xf32>
    %52 = arith.index_cast %1 : i32 to index
    %c7_31 = arith.constant 7 : index
    %53 = memref.load %arg3[%52, %c7_31] : memref<2x8xf32, #tpu.memory_space<smem>>
    %54 = vector.broadcast %53 : f32 to vector<64x256xf32>
    %55 = arith.mulf %51, %54 : vector<64x256xf32>
    %56 = arith.addf %49, %55 : vector<64x256xf32>
    %c0_32 = arith.constant 0 : index
    %c0_33 = arith.constant 0 : index
    %c0_34 = arith.constant 0 : index
    %57 = vector.load %arg5[%c0_32, %c0_33, %c0_34] : memref<1x64x256xf32, #tpu.memory_space<vmem>>, vector<1x64x256xf32>
    %58 = vector.shape_cast %57 : vector<1x64x256xf32> to vector<64x256xf32>
    %59 = vector.shape_cast %56 : vector<64x256xf32> to vector<1x64x256xf32>
    tpu.vector_store %arg5[%c0_32, %c0_33, %c0_34], %59 {strides = array<i32>} : memref<1x64x256xf32, #tpu.memory_space<vmem>>, vector<1x64x256xf32>,
    return
  }
  func.func @transform_0(%arg0: i32, %arg1: i32, %arg2: i32) -> (i32, i32) {
    %c0_i32 = arith.constant 0 : i32
    %c0_i32_0 = arith.constant 0 : i32
    %c0_i32_1 = arith.constant 0 : i32
    return %c0_i32, %c0_i32_0 : i32, i32
  }
  func.func @transform_1(%arg0: i32, %arg1: i32, %arg2: i32) -> (i32, i32, i32, i32) {
    %c0_i32 = arith.constant 0 : i32
    %c0_i32_0 = arith.constant 0 : i32
    return %arg0, %c0_i32, %arg1, %arg2 : i32, i32, i32, i32
  }
  func.func @transform_2(%arg0: i32, %arg1: i32, %arg2: i32) -> (i32, i32, i32) {
    %c0_i32 = arith.constant 0 : i32
    return %arg0, %arg1, %arg2 : i32, i32, i32
  }
}

</mosaic_0001>

<llo_original>
// kernel: tpu_custom_call.1
$region0: #{tpu_custom_call.1}
  #allocation0 [shape = 'u32[]', space=smem, size = 0x4, offset = 0x4, fixed_abs, tag = 'smem constant byte address 0x4 - core index']
  #allocation1 [shape = 'u32[144,128]{1,0:T(1,128)}', space=vmem, size = 0x12000, scoped, tag = 'internal scratch']
  %s0 = inlined_call_operand.hbm [shape: f32[2,8], index: 0, kind: input, shape index: {}]
  %s1 = inlined_call_operand.hbm [shape: f32[2,8,64,256], index: 1, kind: input, shape index: {}]
  %s2 = inlined_call_operand.hbm [shape: f32[2,64,256], index: 2, kind: output, shape index: {}]
  %s3 = sld [smem:[#allocation0]]
  $region49: #{tpu_custom_call.1} parent=0
    _
  %s5 = ssub.s32 1, %s3
  %s6 = scalar_select 0, %s5, %s3
  $region1: #{tpu_custom_call.1} parent=0
    #allocation2 [shape = 'u8[1024]{0}', space=smem, size = 0x400, scoped, tag = 'input window, operand 0, single buffered']
    #allocation3 [shape = 's32[2]{0}', space=sflag, size = 0x8, scoped, tag = 'scoped memory for tpu_custom_call.1']
    #allocation4 [shape = 's32[2]{0}', space=sflag, size = 0x8, scoped, tag = 'scoped memory for tpu_custom_call.1']
    #allocation5 [shape = 's32[2]{0}', space=sflag, size = 0x8, scoped, tag = 'scoped memory for tpu_custom_call.1']
    #allocation6 [shape = 'u8[1048576]{0}', space=vmem, size = 0x100000, scoped, tag = 'input window, operand 1']
    #allocation7 [shape = 'u8[131072]{0}', space=vmem, size = 0x20000, scoped, tag = 'output window, operand 0']
    %7 = vsyncpa [#allocation5], 0
    %8 = vsyncpa [#allocation3], 0
    %s9 = scalar_lea.sflag [#allocation3], 1
    %10 = vsyncpa %s9, 0
    %11 = vsyncpa [#allocation4], 0
    %s12 = scalar_lea.sflag [#allocation4], 1
    %13 = vsyncpa %s12, 0
    loop: start=0, step=1, limit=4
    $region2: #{tpu_custom_call.1} parent=1 // loop_pre_header
      _
    $region3: #{tpu_custom_call.1} parent=1 // loop_header
      %s15 = sphi 0, %s19
      %p16 = scmp.ge.s32.totalorder %s15, 4
      %s22 = sphi 0, %s41
      %s23 = sphi 0, %s37
      %s24 = sphi 0, %s33
      %s25 = sphi 0, %s22
      %s26 = sphi 0, %s23
      %s27 = sphi 0, %s24
      %s28 = sphi 0, %s25
      %s29 = sphi 0, %s26
      %s30 = sphi 0, %s27
      %s42 = sphi 0, %s42
      %s44 = sphi 0, %s42
      %s45 = sphi 0, %s44
      %s59 = sphi 0, %s45
      %s69 = sphi 0, %s71
      %s72 = sphi 0, %s69
      %s73 = sphi 0, %s72
      %s89 = sphi 0, %s73
      %s99 = sphi 0, %s101
      %s102 = sphi 0, %s99
      %s103 = sphi 0, %s102
      %s119 = sphi 0, %s103
    $region4: #{tpu_custom_call.1} parent=1 // loop_header_branch
      %18 = sbr.rel (%p16) target = $region8
    $region5: #{tpu_custom_call.1} parent=1 // loop_body
      %s20 = ssub.s32 %s15, 1
      %s21 = ssub.s32 %s15, 2
      %s31 = sadd.s32 1, %s24
      %p32 = scmp.ge.s32.totalorder %s31, 1
      %s33 = scalar_select %p32, 0, %s31
      %s34 = sadd.s32 1, %s23
      %s35 = scalar_select %p32, %s34, %s23
      %p36 = scmp.ge.s32.totalorder %s35, 1
      %s37 = scalar_select %p36, 0, %s35
      %s38 = sadd.s32 1, %s22
      %s39 = scalar_select %p36, %s38, %s22
      %p40 = scmp.ge.s32.totalorder %s39, 2
      %s41 = scalar_select %p40, 0, %s39
      %s43 = sadd.s32 %s42, 1
      %p46 = scmp.eq.s32.totalorder %s15, 1
      %p47 = scmp.ne.s32.totalorder %s42, %s44
      %p48 = scmp.eq.s32.totalorder %s15, 0
      %p49 = por %p47, %p48
      %p50 = scmp.ne.s32.totalorder %s42, %s44
      %p51 = scmp.eq.s32.totalorder %s20, 1
      %p52 = por %p50, %p51
      %p53 = scmp.ne.s32.totalorder %s44, %s45
      %p54 = scmp.eq.s32.totalorder %s20, 0
      %p55 = por %p53, %p54
      %p56 = scmp.ne.s32.totalorder %s44, %s45
      %p57 = scmp.eq.s32.totalorder %s21, 1
      %p58 = por %p56, %p57
      %p60 = scmp.ne.s32.totalorder %s45, %s59
      %p61 = scmp.eq.s32.totalorder %s21, 0
      %p62 = por %p60, %p61
      %s63 = ssub.s32 %s22, %s41
      %s64 = ssub.s32 %s23, %s37
      %s65 = sor.u32 %s63, %s64
      %s66 = ssub.s32 %s24, %s33
      %s67 = sor.u32 %s65, %s66
      %p68 = scmp.eq.s32.totalorder %s67, 0
      %s70 = sadd.s32 %s69, 1
      %s71 = scalar_select %p68, %s69, %s70
      %p74 = pneg %p68
      %p75 = scmp.eq.s32.totalorder %s15, 1
      %p76 = por %p74, %p75
      %p77 = scmp.ne.s32.totalorder %s69, %s72
      %p78 = scmp.eq.s32.totalorder %s15, 0
      %p79 = por %p77, %p78
      %p80 = scmp.ne.s32.totalorder %s69, %s72
      %p81 = scmp.eq.s32.totalorder %s20, 1
      %p82 = por %p80, %p81
      %p83 = scmp.ne.s32.totalorder %s72, %s73
      %p84 = scmp.eq.s32.totalorder %s20, 0
      %p85 = por %p83, %p84
      %p86 = scmp.ne.s32.totalorder %s72, %s73
      %p87 = scmp.eq.s32.totalorder %s21, 1
      %p88 = por %p86, %p87
      %p90 = scmp.ne.s32.totalorder %s73, %s89
      %p91 = scmp.eq.s32.totalorder %s21, 0
      %p92 = por %p90, %p91
      %s93 = ssub.s32 %s22, %s41
      %s94 = ssub.s32 %s23, %s37
      %s95 = sor.u32 %s93, %s94
      %s96 = ssub.s32 %s24, %s33
      %s97 = sor.u32 %s95, %s96
      %p98 = scmp.eq.s32.totalorder %s97, 0
      %s100 = sadd.s32 %s99, 1
      %s101 = scalar_select %p98, %s99, %s100
      %p104 = pneg %p98
      %p105 = scmp.eq.s32.totalorder %s15, 1
      %p106 = por %p104, %p105
      %p107 = scmp.ne.s32.totalorder %s99, %s102
      %p108 = scmp.eq.s32.totalorder %s15, 0
      %p109 = por %p107, %p108
      %p110 = scmp.ne.s32.totalorder %s99, %s102
      %p111 = scmp.eq.s32.totalorder %s20, 1
      %p112 = por %p110, %p111
      %p113 = scmp.ne.s32.totalorder %s102, %s103
      %p114 = scmp.eq.s32.totalorder %s20, 0
      %p115 = por %p113, %p114
      %p116 = scmp.ne.s32.totalorder %s102, %s103
      %p117 = scmp.eq.s32.totalorder %s21, 1
      %p118 = por %p116, %p117
      %p120 = scmp.ne.s32.totalorder %s103, %s119
      %p121 = scmp.eq.s32.totalorder %s21, 0
      %p122 = por %p120, %p121
      %p123 = scmp.le.s32.totalorder 1, %s15
      %p124 = scmp.lt.s32.totalorder %s15, 3
      %p125 = pnand %p123, %p124
      %p126 = pneg %p125
      // Predicated region
      $region9: #{tpu_custom_call.1} parent=5 // pred_check
        _
      $region10: #{tpu_custom_call.1} parent=5 // pred_check_branch
        %128 = sbr.rel (%p125) target = $region12
      $region11: #{tpu_custom_call.1} parent=5 // pred_region
        %s129 = ssub.s32 %s15, 1
        // Predicated region
        $region13: #{tpu_custom_call.1} parent=11 // pred_check
          %p130 = pneg %p55
        $region14: #{tpu_custom_call.1} parent=11 // pred_check_branch
          %132 = sbr.rel (%p130) target = $region16
        $region15: #{tpu_custom_call.1} parent=11 // pred_region
          %s134 = ssub.s32 32, 32
          %135 = vsyncadd [#allocation5], %s134
          %138 = dma.hbm_to_smem %s0, 32, [#allocation2], [#allocation5]
        $region16: #{tpu_custom_call.1} parent=11 // pred_fallthru
          _
      $region12: #{tpu_custom_call.1} parent=5 // pred_fallthru
        _
      %p139 = scmp.lt.s32.totalorder %s15, 2
      // Predicated region
      $region17: #{tpu_custom_call.1} parent=5 // pred_check
        %p140 = pneg %p139
      $region18: #{tpu_custom_call.1} parent=5 // pred_check_branch
        %142 = sbr.rel (%p140) target = $region20
      $region19: #{tpu_custom_call.1} parent=5 // pred_region
        // Predicated region
        $region21: #{tpu_custom_call.1} parent=19 // pred_check
          %p143 = pneg %p79
        $region22: #{tpu_custom_call.1} parent=19 // pred_check_branch
          %145 = sbr.rel (%p143) target = $region24
        $region23: #{tpu_custom_call.1} parent=19 // pred_region
          %s146 = sand.u32 %s69, 1
          %s147 = scalar_lea.sflag [#allocation3], %s146
          %s148 = sand.u32 %s69, 1
          %s149 = smul.addr %s148, 1024
          %s150 = scalar_lea.vmem [#allocation6], %s149
          %s151 = smul.u32 8, %s23
          %s152 = smul.u32 2, %s24
          %s154 = ssub.s32 16384, 16384
          %155 = vsyncadd %s147, %s154
          %s156 = smul.addr %s151, 2
          %s157 = sadd.s32 %s152, %s156
          %s158 = smul.addr %s22, 128
          %s159 = sadd.s32 %s157, %s158
          %s160 = smul.addr %s159, 128
          %s161 = scalar_lea.hbm %s1, %s160
          %s162 = sshll.u32 %s150, 4
          %s163 = int_to_ptr.vmem [resolvable:$true] %s162
          %168 = dma.hbm_to_vmem [thread:$0]  %s161, 16384, %s163, %s147, 256, 256, 16
        $region24: #{tpu_custom_call.1} parent=19 // pred_fallthru
          _
      $region20: #{tpu_custom_call.1} parent=5 // pred_fallthru
        _
      %p169 = scmp.le.s32.totalorder 1, %s15
      %p170 = scmp.lt.s32.totalorder %s15, 3
      %p171 = pnand %p169, %p170
      %p172 = pneg %p171
      // Predicated region
      $region25: #{tpu_custom_call.1} parent=5 // pred_check
        _
      $region26: #{tpu_custom_call.1} parent=5 // pred_check_branch
        %174 = sbr.rel (%p171) target = $region28
      $region27: #{tpu_custom_call.1} parent=5 // pred_region
        %s175 = ssub.s32 %s15, 1
        // Predicated region
        $region29: #{tpu_custom_call.1} parent=27 // pred_check
          %p176 = pneg %p55
        $region30: #{tpu_custom_call.1} parent=27 // pred_check_branch
          %178 = sbr.rel (%p176) target = $region32
        $region31: #{tpu_custom_call.1} parent=27 // pred_region
          %179 = dma.done [#allocation5], 32
        $region32: #{tpu_custom_call.1} parent=27 // pred_fallthru
          _
        %s180 = sand.u32 %s72, 1
        %s181 = scalar_lea.sflag [#allocation3], %s180
        %s182 = sand.u32 %s72, 1
        %s183 = smul.addr %s182, 1024
        %s184 = scalar_lea.vmem [#allocation6], %s183
        // Predicated region
        $region33: #{tpu_custom_call.1} parent=27 // pred_check
          %p185 = pneg %p85
        $region34: #{tpu_custom_call.1} parent=27 // pred_check_branch
          %187 = sbr.rel (%p185) target = $region36
        $region35: #{tpu_custom_call.1} parent=27 // pred_region
          %188 = dma.done %s181, 16384
        $region36: #{tpu_custom_call.1} parent=27 // pred_fallthru
          _
        %189 = sfence
        %p190 = pneg %p55
        %p191 = pneg %p52
        %s192 = sand.u32 %s72, 1
        %s193 = scalar_lea.sflag [#allocation3], %s192
        %s194 = sand.u32 %s72, 1
        %s195 = smul.addr %s194, 1024
        %s196 = scalar_lea.vmem [#allocation6], %s195
        %p197 = pneg %p85
        %p198 = pneg %p82
        %p199 = pneg %p115
        %p200 = pneg %p112
        %s201 = sand.u32 %s102, 1
        %s202 = scalar_lea.sflag [#allocation4], %s201
        %s203 = sand.u32 %s102, 1
        %s204 = smul.addr %s203, 128
        %s205 = scalar_lea.vmem [#allocation7], %s204
        %s206 = smul.u32 8, %s26
        %s207 = smul.u32 2, %s27
        %s208 = smul.u32 8, %s26
        %s209 = smul.u32 2, %s27
        %v210 = vld [vmem:[%s184] sm:$0xff]
        %v211 = vld [vmem:[%s184 + $0x8] sm:$0xff]
        %v212 = vld [vmem:[%s184 + $0x10] sm:$0xff]
        %v213 = vld [vmem:[%s184 + $0x18] sm:$0xff]
        %v214 = vld [vmem:[%s184 + $0x20] sm:$0xff]
        %v215 = vld [vmem:[%s184 + $0x28] sm:$0xff]
        %v216 = vld [vmem:[%s184 + $0x30] sm:$0xff]
        %v217 = vld [vmem:[%s184 + $0x38] sm:$0xff]
        %v218 = vld [vmem:[%s184 + $0x40] sm:$0xff]
        %v219 = vld [vmem:[%s184 + $0x48] sm:$0xff]
        %v220 = vld [vmem:[%s184 + $0x50] sm:$0xff]
        %v221 = vld [vmem:[%s184 + $0x58] sm:$0xff]
        %v222 = vld [vmem:[%s184 + $0x60] sm:$0xff]
        %v223 = vld [vmem:[%s184 + $0x68] sm:$0xff]
        %v224 = vld [vmem:[%s184 + $0x70] sm:$0xff]
        %v225 = vld [vmem:[%s184 + $0x78] sm:$0xff]
        %s226 = smul.u32 %s25, 128
        %s227 = sld [smem:[#allocation2 + %s226]]
        %v228 = vstv %s227
        %v229 = vmul.f32 %v210, %v228
        %v230 = vmul.f32 %v211, %v228
        %v231 = vmul.f32 %v212, %v228
        %v232 = vmul.f32 %v213, %v228
        %v233 = vmul.f32 %v214, %v228
        %v234 = vmul.f32 %v215, %v228
        %v235 = vmul.f32 %v216, %v228
        %v236 = vmul.f32 %v217, %v228
        %v237 = vmul.f32 %v218, %v228
        %v238 = vmul.f32 %v219, %v228
        %v239 = vmul.f32 %v220, %v228
        %v240 = vmul.f32 %v221, %v228
        %v241 = vmul.f32 %v222, %v228
        %v242 = vmul.f32 %v223, %v228
        %v243 = vmul.f32 %v224, %v228
        %v244 = vmul.f32 %v225, %v228
        %s245 = scalar_lea.vmem %s184, 128 [#allocation6]
        %v246 = vld [vmem:[%s245] sm:$0xff]
        %v247 = vld [vmem:[%s245 + $0x8] sm:$0xff]
        %v248 = vld [vmem:[%s245 + $0x10] sm:$0xff]
        %v249 = vld [vmem:[%s245 + $0x18] sm:$0xff]
        %v250 = vld [vmem:[%s245 + $0x20] sm:$0xff]
        %v251 = vld [vmem:[%s245 + $0x28] sm:$0xff]
        %v252 = vld [vmem:[%s245 + $0x30] sm:$0xff]
        %v253 = vld [vmem:[%s245 + $0x38] sm:$0xff]
        %v254 = vld [vmem:[%s245 + $0x40] sm:$0xff]
        %v255 = vld [vmem:[%s245 + $0x48] sm:$0xff]
        %v256 = vld [vmem:[%s245 + $0x50] sm:$0xff]
        %v257 = vld [vmem:[%s245 + $0x58] sm:$0xff]
        %v258 = vld [vmem:[%s245 + $0x60] sm:$0xff]
        %v259 = vld [vmem:[%s245 + $0x68] sm:$0xff]
        %v260 = vld [vmem:[%s245 + $0x70] sm:$0xff]
        %v261 = vld [vmem:[%s245 + $0x78] sm:$0xff]
        %s262 = sadd.s32 %s226, 1
        %s263 = sld [smem:[#allocation2 + %s262]]
        %v264 = vstv %s263
        %v265 = vmul.f32 %v246, %v264
        %v266 = vmul.f32 %v247, %v264
        %v267 = vmul.f32 %v248, %v264
        %v268 = vmul.f32 %v249, %v264
        %v269 = vmul.f32 %v250, %v264
        %v270 = vmul.f32 %v251, %v264
        %v271 = vmul.f32 %v252, %v264
        %v272 = vmul.f32 %v253, %v264
        %v273 = vmul.f32 %v254, %v264
        %v274 = vmul.f32 %v255, %v264
        %v275 = vmul.f32 %v256, %v264
        %v276 = vmul.f32 %v257, %v264
        %v277 = vmul.f32 %v258, %v264
        %v278 = vmul.f32 %v259, %v264
        %v279 = vmul.f32 %v260, %v264
        %v280 = vmul.f32 %v261, %v264
        %v281 = vadd.f32 %v229, %v265
        %v282 = vadd.f32 %v230, %v266
        %v283 = vadd.f32 %v231, %v267
        %v284 = vadd.f32 %v232, %v268
        %v285 = vadd.f32 %v233, %v269
        %v286 = vadd.f32 %v234, %v270
        %v287 = vadd.f32 %v235, %v271
        %v288 = vadd.f32 %v236, %v272
        %v289 = vadd.f32 %v237, %v273
        %v290 = vadd.f32 %v238, %v274
        %v291 = vadd.f32 %v239, %v275
        %v292 = vadd.f32 %v240, %v276
        %v293 = vadd.f32 %v241, %v277
        %v294 = vadd.f32 %v242, %v278
        %v295 = vadd.f32 %v243, %v279
        %v296 = vadd.f32 %v244, %v280
        %s297 = scalar_lea.vmem %s184, 256 [#allocation6]
        %v298 = vld [vmem:[%s297] sm:$0xff]
        %v299 = vld [vmem:[%s297 + $0x8] sm:$0xff]
        %v300 = vld [vmem:[%s297 + $0x10] sm:$0xff]
        %v301 = vld [vmem:[%s297 + $0x18] sm:$0xff]
        %v302 = vld [vmem:[%s297 + $0x20] sm:$0xff]
        %v303 = vld [vmem:[%s297 + $0x28] sm:$0xff]
        %v304 = vld [vmem:[%s297 + $0x30] sm:$0xff]
        %v305 = vld [vmem:[%s297 + $0x38] sm:$0xff]
        %v306 = vld [vmem:[%s297 + $0x40] sm:$0xff]
        %v307 = vld [vmem:[%s297 + $0x48] sm:$0xff]
        %v308 = vld [vmem:[%s297 + $0x50] sm:$0xff]
        %v309 = vld [vmem:[%s297 + $0x58] sm:$0xff]
        %v310 = vld [vmem:[%s297 + $0x60] sm:$0xff]
        %v311 = vld [vmem:[%s297 + $0x68] sm:$0xff]
        %v312 = vld [vmem:[%s297 + $0x70] sm:$0xff]
        %v313 = vld [vmem:[%s297 + $0x78] sm:$0xff]
        %s314 = sadd.s32 %s226, 2
        %s315 = sld [smem:[#allocation2 + %s314]]
        %v316 = vstv %s315
        %v317 = vmul.f32 %v298, %v316
        %v318 = vmul.f32 %v299, %v316
        %v319 = vmul.f32 %v300, %v316
        %v320 = vmul.f32 %v301, %v316
        %v321 = vmul.f32 %v302, %v316
        %v322 = vmul.f32 %v303, %v316
        %v323 = vmul.f32 %v304, %v316
        %v324 = vmul.f32 %v305, %v316
        %v325 = vmul.f32 %v306, %v316
        %v326 = vmul.f32 %v307, %v316
        %v327 = vmul.f32 %v308, %v316
        %v328 = vmul.f32 %v309, %v316
        %v329 = vmul.f32 %v310, %v316
        %v330 = vmul.f32 %v311, %v316
        %v331 = vmul.f32 %v312, %v316
        %v332 = vmul.f32 %v313, %v316
        %v333 = vadd.f32 %v281, %v317
        %v334 = vadd.f32 %v282, %v318
        %v335 = vadd.f32 %v283, %v319
        %v336 = vadd.f32 %v284, %v320
        %v337 = vadd.f32 %v285, %v321
        %v338 = vadd.f32 %v286, %v322
        %v339 = vadd.f32 %v287, %v323
        %v340 = vadd.f32 %v288, %v324
        %v341 = vadd.f32 %v289, %v325
        %v342 = vadd.f32 %v290, %v326
        %v343 = vadd.f32 %v291, %v327
        %v344 = vadd.f32 %v292, %v328
        %v345 = vadd.f32 %v293, %v329
        %v346 = vadd.f32 %v294, %v330
        %v347 = vadd.f32 %v295, %v331
        %v348 = vadd.f32 %v296, %v332
        %s349 = scalar_lea.vmem %s184, 384 [#allocation6]
        %v350 = vld [vmem:[%s349] sm:$0xff]
        %v351 = vld [vmem:[%s349 + $0x8] sm:$0xff]
        %v352 = vld [vmem:[%s349 + $0x10] sm:$0xff]
        %v353 = vld [vmem:[%s349 + $0x18] sm:$0xff]
        %v354 = vld [vmem:[%s349 + $0x20] sm:$0xff]
        %v355 = vld [vmem:[%s349 + $0x28] sm:$0xff]
        %v356 = vld [vmem:[%s349 + $0x30] sm:$0xff]
        %v357 = vld [vmem:[%s349 + $0x38] sm:$0xff]
        %v358 = vld [vmem:[%s349 + $0x40] sm:$0xff]
        %v359 = vld [vmem:[%s349 + $0x48] sm:$0xff]
        %v360 = vld [vmem:[%s349 + $0x50] sm:$0xff]
        %v361 = vld [vmem:[%s349 + $0x58] sm:$0xff]
        %v362 = vld [vmem:[%s349 + $0x60] sm:$0xff]
        %v363 = vld [vmem:[%s349 + $0x68] sm:$0xff]
        %v364 = vld [vmem:[%s349 + $0x70] sm:$0xff]
        %v365 = vld [vmem:[%s349 + $0x78] sm:$0xff]
        %s366 = sadd.s32 %s226, 3
        %s367 = sld [smem:[#allocation2 + %s366]]
        %v368 = vstv %s367
        %v369 = vmul.f32 %v350, %v368
        %v370 = vmul.f32 %v351, %v368
        %v371 = vmul.f32 %v352, %v368
        %v372 = vmul.f32 %v353, %v368
        %v373 = vmul.f32 %v354, %v368
        %v374 = vmul.f32 %v355, %v368
        %v375 = vmul.f32 %v356, %v368
        %v376 = vmul.f32 %v357, %v368
        %v377 = vmul.f32 %v358, %v368
        %v378 = vmul.f32 %v359, %v368
        %v379 = vmul.f32 %v360, %v368
        %v380 = vmul.f32 %v361, %v368
        %v381 = vmul.f32 %v362, %v368
        %v382 = vmul.f32 %v363, %v368
        %v383 = vmul.f32 %v364, %v368
        %v384 = vmul.f32 %v365, %v368
        %v385 = vadd.f32 %v333, %v369
        %v386 = vadd.f32 %v334, %v370
        %v387 = vadd.f32 %v335, %v371
        %v388 = vadd.f32 %v336, %v372
        %v389 = vadd.f32 %v337, %v373
        %v390 = vadd.f32 %v338, %v374
        %v391 = vadd.f32 %v339, %v375
        %v392 = vadd.f32 %v340, %v376
        %v393 = vadd.f32 %v341, %v377
        %v394 = vadd.f32 %v342, %v378
        %v395 = vadd.f32 %v343, %v379
        %v396 = vadd.f32 %v344, %v380
        %v397 = vadd.f32 %v345, %v381
        %v398 = vadd.f32 %v346, %v382
        %v399 = vadd.f32 %v347, %v383
        %v400 = vadd.f32 %v348, %v384
        %s401 = scalar_lea.vmem %s184, 512 [#allocation6]
        %v402 = vld [vmem:[%s401] sm:$0xff]
        %v403 = vld [vmem:[%s401 + $0x8] sm:$0xff]
        %v404 = vld [vmem:[%s401 + $0x10] sm:$0xff]
        %v405 = vld [vmem:[%s401 + $0x18] sm:$0xff]
        %v406 = vld [vmem:[%s401 + $0x20] sm:$0xff]
        %v407 = vld [vmem:[%s401 + $0x28] sm:$0xff]
        %v408 = vld [vmem:[%s401 + $0x30] sm:$0xff]
        %v409 = vld [vmem:[%s401 + $0x38] sm:$0xff]
        %v410 = vld [vmem:[%s401 + $0x40] sm:$0xff]
        %v411 = vld [vmem:[%s401 + $0x48] sm:$0xff]
        %v412 = vld [vmem:[%s401 + $0x50] sm:$0xff]
        %v413 = vld [vmem:[%s401 + $0x58] sm:$0xff]
        %v414 = vld [vmem:[%s401 + $0x60] sm:$0xff]
        %v415 = vld [vmem:[%s401 + $0x68] sm:$0xff]
        %v416 = vld [vmem:[%s401 + $0x70] sm:$0xff]
        %v417 = vld [vmem:[%s401 + $0x78] sm:$0xff]
        %s418 = sadd.s32 %s226, 4
        %s419 = sld [smem:[#allocation2 + %s418]]
        %v420 = vstv %s419
        %v421 = vmul.f32 %v402, %v420
        %v422 = vmul.f32 %v403, %v420
        %v423 = vmul.f32 %v404, %v420
        %v424 = vmul.f32 %v405, %v420
        %v425 = vmul.f32 %v406, %v420
        %v426 = vmul.f32 %v407, %v420
        %v427 = vmul.f32 %v408, %v420
        %v428 = vmul.f32 %v409, %v420
        %v429 = vmul.f32 %v410, %v420
        %v430 = vmul.f32 %v411, %v420
        %v431 = vmul.f32 %v412, %v420
        %v432 = vmul.f32 %v413, %v420
        %v433 = vmul.f32 %v414, %v420
        %v434 = vmul.f32 %v415, %v420
        %v435 = vmul.f32 %v416, %v420
        %v436 = vmul.f32 %v417, %v420
        %v437 = vadd.f32 %v385, %v421
        %v438 = vadd.f32 %v386, %v422
        %v439 = vadd.f32 %v387, %v423
        %v440 = vadd.f32 %v388, %v424
        %v441 = vadd.f32 %v389, %v425
        %v442 = vadd.f32 %v390, %v426
        %v443 = vadd.f32 %v391, %v427
        %v444 = vadd.f32 %v392, %v428
        %v445 = vadd.f32 %v393, %v429
        %v446 = vadd.f32 %v394, %v430
        %v447 = vadd.f32 %v395, %v431
        %v448 = vadd.f32 %v396, %v432
        %v449 = vadd.f32 %v397, %v433
        %v450 = vadd.f32 %v398, %v434
        %v451 = vadd.f32 %v399, %v435
        %v452 = vadd.f32 %v400, %v436
        %s453 = scalar_lea.vmem %s184, 640 [#allocation6]
        %v454 = vld [vmem:[%s453] sm:$0xff]
        %v455 = vld [vmem:[%s453 + $0x8] sm:$0xff]
        %v456 = vld [vmem:[%s453 + $0x10] sm:$0xff]
        %v457 = vld [vmem:[%s453 + $0x18] sm:$0xff]
        %v458 = vld [vmem:[%s453 + $0x20] sm:$0xff]
        %v459 = vld [vmem:[%s453 + $0x28] sm:$0xff]
        %v460 = vld [vmem:[%s453 + $0x30] sm:$0xff]
        %v461 = vld [vmem:[%s453 + $0x38] sm:$0xff]
        %v462 = vld [vmem:[%s453 + $0x40] sm:$0xff]
        %v463 = vld [vmem:[%s453 + $0x48] sm:$0xff]
        %v464 = vld [vmem:[%s453 + $0x50] sm:$0xff]
        %v465 = vld [vmem:[%s453 + $0x58] sm:$0xff]
        %v466 = vld [vmem:[%s453 + $0x60] sm:$0xff]
        %v467 = vld [vmem:[%s453 + $0x68] sm:$0xff]
        %v468 = vld [vmem:[%s453 + $0x70] sm:$0xff]
        %v469 = vld [vmem:[%s453 + $0x78] sm:$0xff]
        %s470 = sadd.s32 %s226, 5
        %s471 = sld [smem:[#allocation2 + %s470]]
        %v472 = vstv %s471
        %v473 = vmul.f32 %v454, %v472
        %v474 = vmul.f32 %v455, %v472
        %v475 = vmul.f32 %v456, %v472
        %v476 = vmul.f32 %v457, %v472
        %v477 = vmul.f32 %v458, %v472
        %v478 = vmul.f32 %v459, %v472
        %v479 = vmul.f32 %v460, %v472
        %v480 = vmul.f32 %v461, %v472
        %v481 = vmul.f32 %v462, %v472
        %v482 = vmul.f32 %v463, %v472
        %v483 = vmul.f32 %v464, %v472
        %v484 = vmul.f32 %v465, %v472
        %v485 = vmul.f32 %v466, %v472
        %v486 = vmul.f32 %v467, %v472
        %v487 = vmul.f32 %v468, %v472
        %v488 = vmul.f32 %v469, %v472
        %v489 = vadd.f32 %v437, %v473
        %v490 = vadd.f32 %v438, %v474
        %v491 = vadd.f32 %v439, %v475
        %v492 = vadd.f32 %v440, %v476
        %v493 = vadd.f32 %v441, %v477
        %v494 = vadd.f32 %v442, %v478
        %v495 = vadd.f32 %v443, %v479
        %v496 = vadd.f32 %v444, %v480
        %v497 = vadd.f32 %v445, %v481
        %v498 = vadd.f32 %v446, %v482
        %v499 = vadd.f32 %v447, %v483
        %v500 = vadd.f32 %v448, %v484
        %v501 = vadd.f32 %v449, %v485
        %v502 = vadd.f32 %v450, %v486
        %v503 = vadd.f32 %v451, %v487
        %v504 = vadd.f32 %v452, %v488
        %s505 = scalar_lea.vmem %s184, 768 [#allocation6]
        %v506 = vld [vmem:[%s505] sm:$0xff]
        %v507 = vld [vmem:[%s505 + $0x8] sm:$0xff]
        %v508 = vld [vmem:[%s505 + $0x10] sm:$0xff]
        %v509 = vld [vmem:[%s505 + $0x18] sm:$0xff]
        %v510 = vld [vmem:[%s505 + $0x20] sm:$0xff]
        %v511 = vld [vmem:[%s505 + $0x28] sm:$0xff]
        %v512 = vld [vmem:[%s505 + $0x30] sm:$0xff]
        %v513 = vld [vmem:[%s505 + $0x38] sm:$0xff]
        %v514 = vld [vmem:[%s505 + $0x40] sm:$0xff]
        %v515 = vld [vmem:[%s505 + $0x48] sm:$0xff]
        %v516 = vld [vmem:[%s505 + $0x50] sm:$0xff]
        %v517 = vld [vmem:[%s505 + $0x58] sm:$0xff]
        %v518 = vld [vmem:[%s505 + $0x60] sm:$0xff]
        %v519 = vld [vmem:[%s505 + $0x68] sm:$0xff]
        %v520 = vld [vmem:[%s505 + $0x70] sm:$0xff]
        %v521 = vld [vmem:[%s505 + $0x78] sm:$0xff]
        %s522 = sadd.s32 %s226, 6
        %s523 = sld [smem:[#allocation2 + %s522]]
        %v524 = vstv %s523
        %v525 = vmul.f32 %v506, %v524
        %v526 = vmul.f32 %v507, %v524
        %v527 = vmul.f32 %v508, %v524
        %v528 = vmul.f32 %v509, %v524
        %v529 = vmul.f32 %v510, %v524
        %v530 = vmul.f32 %v511, %v524
        %v531 = vmul.f32 %v512, %v524
        %v532 = vmul.f32 %v513, %v524
        %v533 = vmul.f32 %v514, %v524
        %v534 = vmul.f32 %v515, %v524
        %v535 = vmul.f32 %v516, %v524
        %v536 = vmul.f32 %v517, %v524
        %v537 = vmul.f32 %v518, %v524
        %v538 = vmul.f32 %v519, %v524
        %v539 = vmul.f32 %v520, %v524
        %v540 = vmul.f32 %v521, %v524
        %v541 = vadd.f32 %v489, %v525
        %v542 = vadd.f32 %v490, %v526
        %v543 = vadd.f32 %v491, %v527
        %v544 = vadd.f32 %v492, %v528
        %v545 = vadd.f32 %v493, %v529
        %v546 = vadd.f32 %v494, %v530
        %v547 = vadd.f32 %v495, %v531
        %v548 = vadd.f32 %v496, %v532
        %v549 = vadd.f32 %v497, %v533
        %v550 = vadd.f32 %v498, %v534
        %v551 = vadd.f32 %v499, %v535
        %v552 = vadd.f32 %v500, %v536
        %v553 = vadd.f32 %v501, %v537
        %v554 = vadd.f32 %v502, %v538
        %v555 = vadd.f32 %v503, %v539
        %v556 = vadd.f32 %v504, %v540
        %s557 = scalar_lea.vmem %s184, 896 [#allocation6]
        %v558 = vld [vmem:[%s557] sm:$0xff]
        %v559 = vld [vmem:[%s557 + $0x8] sm:$0xff]
        %v560 = vld [vmem:[%s557 + $0x10] sm:$0xff]
        %v561 = vld [vmem:[%s557 + $0x18] sm:$0xff]
        %v562 = vld [vmem:[%s557 + $0x20] sm:$0xff]
        %v563 = vld [vmem:[%s557 + $0x28] sm:$0xff]
        %v564 = vld [vmem:[%s557 + $0x30] sm:$0xff]
        %v565 = vld [vmem:[%s557 + $0x38] sm:$0xff]
        %v566 = vld [vmem:[%s557 + $0x40] sm:$0xff]
        %v567 = vld [vmem:[%s557 + $0x48] sm:$0xff]
        %v568 = vld [vmem:[%s557 + $0x50] sm:$0xff]
        %v569 = vld [vmem:[%s557 + $0x58] sm:$0xff]
        %v570 = vld [vmem:[%s557 + $0x60] sm:$0xff]
        %v571 = vld [vmem:[%s557 + $0x68] sm:$0xff]
        %v572 = vld [vmem:[%s557 + $0x70] sm:$0xff]
        %v573 = vld [vmem:[%s557 + $0x78] sm:$0xff]
        %s574 = sadd.s32 %s226, 7
        %s575 = sld [smem:[#allocation2 + %s574]]
        %v576 = vstv %s575
        %v577 = vmul.f32 %v558, %v576
        %v578 = vmul.f32 %v559, %v576
        %v579 = vmul.f32 %v560, %v576
        %v580 = vmul.f32 %v561, %v576
        %v581 = vmul.f32 %v562, %v576
        %v582 = vmul.f32 %v563, %v576
        %v583 = vmul.f32 %v564, %v576
        %v584 = vmul.f32 %v565, %v576
        %v585 = vmul.f32 %v566, %v576
        %v586 = vmul.f32 %v567, %v576
        %v587 = vmul.f32 %v568, %v576
        %v588 = vmul.f32 %v569, %v576
        %v589 = vmul.f32 %v570, %v576
        %v590 = vmul.f32 %v571, %v576
        %v591 = vmul.f32 %v572, %v576
        %v592 = vmul.f32 %v573, %v576
        %v593 = vadd.f32 %v541, %v577
        %v594 = vadd.f32 %v542, %v578
        %v595 = vadd.f32 %v543, %v579
        %v596 = vadd.f32 %v544, %v580
        %v597 = vadd.f32 %v545, %v581
        %v598 = vadd.f32 %v546, %v582
        %v599 = vadd.f32 %v547, %v583
        %v600 = vadd.f32 %v548, %v584
        %v601 = vadd.f32 %v549, %v585
        %v602 = vadd.f32 %v550, %v586
        %v603 = vadd.f32 %v551, %v587
        %v604 = vadd.f32 %v552, %v588
        %v605 = vadd.f32 %v553, %v589
        %v606 = vadd.f32 %v554, %v590
        %v607 = vadd.f32 %v555, %v591
        %v608 = vadd.f32 %v556, %v592
        %609 = vst [vmem:[%s205] sm:$0xff] %v593
        %610 = vst [vmem:[%s205 + $0x8] sm:$0xff] %v594
        %611 = vst [vmem:[%s205 + $0x10] sm:$0xff] %v595
        %612 = vst [vmem:[%s205 + $0x18] sm:$0xff] %v596
        %613 = vst [vmem:[%s205 + $0x20] sm:$0xff] %v597
        %614 = vst [vmem:[%s205 + $0x28] sm:$0xff] %v598
        %615 = vst [vmem:[%s205 + $0x30] sm:$0xff] %v599
        %616 = vst [vmem:[%s205 + $0x38] sm:$0xff] %v600
        %617 = vst [vmem:[%s205 + $0x40] sm:$0xff] %v601
        %618 = vst [vmem:[%s205 + $0x48] sm:$0xff] %v602
        %619 = vst [vmem:[%s205 + $0x50] sm:$0xff] %v603
        %620 = vst [vmem:[%s205 + $0x58] sm:$0xff] %v604
        %621 = vst [vmem:[%s205 + $0x60] sm:$0xff] %v605
        %622 = vst [vmem:[%s205 + $0x68] sm:$0xff] %v606
        %623 = vst [vmem:[%s205 + $0x70] sm:$0xff] %v607
        %624 = vst [vmem:[%s205 + $0x78] sm:$0xff] %v608
        %s625 = sand.u32 %s102, 1
        %s626 = scalar_lea.sflag [#allocation4], %s625
        %s627 = sand.u32 %s102, 1
        %s628 = smul.addr %s627, 128
        %s629 = scalar_lea.vmem [#allocation7], %s628
        // Predicated region
        $region37: #{tpu_custom_call.1} parent=27 // pred_check
          %p630 = pneg %p112
        $region38: #{tpu_custom_call.1} parent=27 // pred_check_branch
          %632 = sbr.rel (%p630) target = $region40
        $region39: #{tpu_custom_call.1} parent=27 // pred_region
          %s633 = smul.u32 8, %s26
          %s634 = smul.u32 2, %s27
          %s636 = ssub.s32 2048, 2048
          %637 = vsyncadd %s626, %s636
          %s638 = smul.addr %s633, 2
          %s639 = sadd.s32 %s634, %s638
          %s640 = smul.addr %s25, 16
          %s641 = sadd.s32 %s639, %s640
          %s642 = smul.addr %s641, 128
          %s643 = scalar_lea.hbm %s2, %s642
          %s644 = sshll.u32 %s629, 4
          %s645 = int_to_ptr.vmem [resolvable:$true] %s644
          %650 = dma.vmem_to_hbm [thread:$0]  %s645, 2048, %s643, %s626, 256, 256, 16
        $region40: #{tpu_custom_call.1} parent=27 // pred_fallthru
          _
      $region28: #{tpu_custom_call.1} parent=5 // pred_fallthru
        _
      %p651 = scmp.le.s32.totalorder 2, %s15
      // Predicated region
      $region41: #{tpu_custom_call.1} parent=5 // pred_check
        %p652 = pneg %p651
      $region42: #{tpu_custom_call.1} parent=5 // pred_check_branch
        %654 = sbr.rel (%p652) target = $region44
      $region43: #{tpu_custom_call.1} parent=5 // pred_region
        %s655 = ssub.s32 %s15, 2
        // Predicated region
        $region45: #{tpu_custom_call.1} parent=43 // pred_check
          %p656 = pneg %p118
        $region46: #{tpu_custom_call.1} parent=43 // pred_check_branch
          %658 = sbr.rel (%p656) target = $region48
        $region47: #{tpu_custom_call.1} parent=43 // pred_region
          %s659 = sand.u32 %s103, 1
          %s660 = scalar_lea.sflag [#allocation4], %s659
          %s661 = sand.u32 %s103, 1
          %s662 = smul.addr %s661, 128
          %s663 = scalar_lea.vmem [#allocation7], %s662
          %664 = dma.done %s660, 2048
        $region48: #{tpu_custom_call.1} parent=43 // pred_fallthru
          _
      $region44: #{tpu_custom_call.1} parent=5 // pred_fallthru
        _
    $region6: #{tpu_custom_call.1} parent=1 // loop_footer
      %s19 = sadd.s32 1, %s15
    $region7: #{tpu_custom_call.1} parent=1 // loop_footer_branch
      %14 = sbr.rel target = $region3
    $region8: #{tpu_custom_call.1} parent=1 // loop_exit
      _
    %665 = vsyncpa [#allocation3], 1
    %s666 = scalar_lea.sflag [#allocation3], 1
    %667 = vsyncpa %s666, 1
    %668 = vsyncpa [#allocation4], 1
    %s669 = scalar_lea.sflag [#allocation4], 1
    %670 = vsyncpa %s669, 1
    %671 = vsyncpa [#allocation5], 1
    %s672 = scalar_lea.sflag [#allocation5], 1
    %673 = vsyncpa %s672, 1

</llo_original>
